<compile_context>
chip_gen: v6e
topology: v6e:2x2x1
jax: 0.10.0
libtpu: 0.0.40
codegen_flags: <defaults>
</compile_context>

<pallas_src>
import jax
import jax.numpy as jnp
from jax.experimental import pallas as pl
from jax.experimental.pallas import tpu as pltpu

_NEG_LARGE = -1e30  # stands in for -inf on padded class columns


def classifier_kernel(x_ref, w_ref, b_ref, out_ref):
    # x tile arrives as bf16 (exact for binary 0/1 inputs); upcast and accumulate in f32.
    # logits[b, c] = sum_d x[b, d] * W[d, c] + bias[c]   (per-class log_prob of x)
    x = x_ref[...].astype(jnp.float32)
    logits = jnp.dot(x, w_ref[...], preferred_element_type=jnp.float32) + b_ref[...]
    # log_softmax over the lane-dense, class-padded last axis.  Padded classes carry
    # bias = -1e30 so they never win the max and contribute ~0 to the sum.
    m = jnp.max(logits, axis=-1, keepdims=True)
    shifted = logits - m
    lse = jnp.log(jnp.sum(jnp.exp(shifted), axis=-1, keepdims=True))
    out_ref[...] = (shifted - lse).astype(out_ref.dtype)


def classifier_forward(x, theta, *, block_b=512):
    """x: (B, D) binary features, theta: (C, D) per-class Bernoulli logits.
    Returns (B, C) log P(class | x) -- same semantics as Classifier.forward."""
    B, D = x.shape
    C = theta.shape[0]

    theta = theta.astype(jnp.float32)
    # Affine fold of the Bernoulli log-prob; bias computed from f32 theta (sum of D terms).
    bias = jnp.sum(jax.nn.log_sigmoid(-theta), axis=1)  # (C,)

    # Pad the class axis up to a multiple of 128 for lane-dense compute/stores.
    C_pad = max(128, ((C + 127) // 128) * 128)
    w = jnp.zeros((D, C_pad), jnp.float32).at[:, :C].set(theta.T)
    b = jnp.full((1, C_pad), _NEG_LARGE, jnp.float32).at[0, :C].set(bias)

    # Batch tiling: big tiles to amortize per-grid-step overhead, but keep >=2 grid
    # steps whenever the batch allows it (v7x has 2 TensorCores per chip).
    b_round = pl.cdiv(B, 8) * 8
    block_b = max(8, min((block_b // 8) * 8, b_round))
    if b_round >= 16 and block_b > b_round // 2:
        block_b = max(8, ((b_round // 2) // 8) * 8)
    n_blocks = pl.cdiv(B, block_b)
    B_pad = n_blocks * block_b

    # Stream x in bf16 (exact for {0,1}); pad the ragged batch tail with zeros.
    # Padded rows are computed and then sliced off -- no correctness impact.
    x_bf16 = jnp.zeros((B_pad, D), jnp.bfloat16).at[:B, :].set(x.astype(jnp.bfloat16))

    out = pl.pallas_call(
        classifier_kernel,
        out_shape=jax.ShapeDtypeStruct((B_pad, C_pad), jnp.float32),
        grid_spec=pltpu.PrefetchScalarGridSpec(
            num_scalar_prefetch=0,
            grid=(n_blocks,),
            in_specs=[
                pl.BlockSpec((block_b, D), lambda i: (i, 0)),
                pl.BlockSpec((D, C_pad), lambda i: (0, 0)),  # invariant block: fetched once
                pl.BlockSpec((1, C_pad), lambda i: (0, 0)),
            ],
            out_specs=pl.BlockSpec((block_b, C_pad), lambda i: (i, 0)),
        ),
        compiler_params=pltpu.CompilerParams(
            dimension_semantics=("parallel",),
        ),
    )(x_bf16, w, b)
    # TODO(synk): for very large D (block_b*D tiles approaching v7x's 64 MiB VMEM), add a
    # K grid axis with an f32 VMEM accumulator (pl.when init / finalize) marked 'arbitrary'.
    return out[:B, :C]


def reference_forward(x, theta):
    """Pure-JAX reference mirroring the PyTorch module semantics."""
    log_p = jax.nn.log_sigmoid(theta)         # (C, D)
    log_1mp = jax.nn.log_sigmoid(-theta)      # (C, D)
    lp = x @ log_p.T + (1.0 - x) @ log_1mp.T  # (B, C)
    log_probs = lp.T                          # stacked: (C, B)
    cond = jax.nn.log_softmax(log_probs, axis=0)
    return cond.T                             # (B, C)


if __name__ == "__main__":
    key = jax.random.PRNGKey(0)
    k_theta, k_x = jax.random.split(key)

    # Small shapes; B=10 deliberately not a multiple of the batch tile to exercise the
    # ragged-tail padding path, and it yields a 2-step grid.
    B, D, C = 10, 128, 4  # batch, binary feature dim, number of generative models (classes)

    theta = jax.random.normal(k_theta, (C, D), dtype=jnp.float32)
    x = jax.random.bernoulli(k_x, p=0.5, shape=(B, D)).astype(jnp.float32)

    out = classifier_forward(x, theta)
    out = jax.block_until_ready(out)

    ref = reference_forward(x, theta)
    assert out.shape == (B, C), out.shape
    assert jnp.allclose(out, ref, atol=1e-4, rtol=1e-4), (out, ref)

    print("KERNEL_OK")
</pallas_src>

<mosaic_0001>
module attributes {stable_mosaic.version = 11 : i64} {
  func.func @classifier_kernel(%arg0: i32, %arg1: memref<8x128xbf16, #tpu.memory_space<vmem>>, %arg2: memref<128x128xf32, #tpu.memory_space<vmem>>, %arg3: memref<1x128xf32, #tpu.memory_space<vmem>>, %arg4: memref<8x128xf32, #tpu.memory_space<vmem>>) attributes {dimension_semantics = [#tpu.dimension_semantics<parallel>], iteration_bounds = array<i64: 2>, scalar_prefetch = 0 : i64, scratch_operands = 0 : i64, tpu.core_type = #tpu.core_type<tc>, window_params = [{transform_indices = @transform_0, window_bounds = array<i64: 8, 128>}, {pipeline_mode = #tpu.pipeline_mode<synchronous>, transform_indices = @transform_1, window_bounds = array<i64: 128, 128>}, {pipeline_mode = #tpu.pipeline_mode<synchronous>, transform_indices = @transform_2, window_bounds = array<i64: 1, 128>}, {transform_indices = @transform_3, window_bounds = array<i64: 8, 128>}]} {
    %c0 = arith.constant 0 : index
    %c0_0 = arith.constant 0 : index
    %0 = vector.load %arg1[%c0, %c0_0] : memref<8x128xbf16, #tpu.memory_space<vmem>>, vector<8x128xbf16>
    %1 = arith.extf %0 : vector<8x128xbf16> to vector<8x128xf32>
    %c0_1 = arith.constant 0 : index
    %c0_2 = arith.constant 0 : index
    %2 = vector.load %arg2[%c0_1, %c0_2] : memref<128x128xf32, #tpu.memory_space<vmem>>, vector<128x128xf32>
    %cst = arith.constant dense<0.000000e+00> : vector<8x128xf32>
    %3 = tpu.matmul %1, %2, %cst {dimension_numbers = #tpu.dot_dimension_numbers<[1], [0], [0], [1], [0, 0, 1, 1], [], []>} : vector<8x128xf32>, vector<128x128xf32>, vector<8x128xf32> -> vector<8x128xf32>
    %c0_3 = arith.constant 0 : index
    %c0_4 = arith.constant 0 : index
    %4 = vector.load %arg3[%c0_3, %c0_4] : memref<1x128xf32, #tpu.memory_space<vmem>>, vector<1x128xf32>
    %5 = vector.broadcast %4 : vector<1x128xf32> to vector<8x128xf32>
    %6 = arith.addf %3, %5 : vector<8x128xf32>
    %cst_5 = arith.constant dense<0xFF800000> : vector<8xf32>
    %7 = vector.multi_reduction <maximumf>, %6, %cst_5 [1] : vector<8x128xf32> to vector<8xf32>
    %8 = vector.shape_cast %7 : vector<8xf32> to vector<8x1xf32>
    %9 = vector.broadcast %8 : vector<8x1xf32> to vector<8x128xf32>
    %10 = arith.subf %6, %9 : vector<8x128xf32>
    %11 = math.exp %10 : vector<8x128xf32>
    %cst_6 = arith.constant dense<0.000000e+00> : vector<8xf32>
    %12 = vector.multi_reduction <add>, %11, %cst_6 [1] : vector<8x128xf32> to vector<8xf32>
    %13 = vector.shape_cast %12 : vector<8xf32> to vector<8x1xf32>
    %14 = math.log %13 : vector<8x1xf32>
    %15 = vector.broadcast %14 : vector<8x1xf32> to vector<8x128xf32>
    %16 = arith.subf %10, %15 : vector<8x128xf32>
    %c0_7 = arith.constant 0 : index
    %c0_8 = arith.constant 0 : index
    %17 = vector.load %arg4[%c0_7, %c0_8] : memref<8x128xf32, #tpu.memory_space<vmem>>, vector<8x128xf32>
    tpu.vector_store %arg4[%c0_7, %c0_8], %16 {strides = array<i32>} : memref<8x128xf32, #tpu.memory_space<vmem>>, vector<8x128xf32>,
    return
  }
  func.func @transform_0(%arg0: i32) -> (i32, i32) {
    %c0_i32 = arith.constant 0 : i32
    %c0_i32_0 = arith.constant 0 : i32
    return %arg0, %c0_i32 : i32, i32
  }
  func.func @transform_1(%arg0: i32) -> (i32, i32) {
    %c0_i32 = arith.constant 0 : i32
    %c0_i32_0 = arith.constant 0 : i32
    %c0_i32_1 = arith.constant 0 : i32
    return %c0_i32, %c0_i32_0 : i32, i32
  }
  func.func @transform_2(%arg0: i32) -> (i32, i32) {
    %c0_i32 = arith.constant 0 : i32
    %c0_i32_0 = arith.constant 0 : i32
    %c0_i32_1 = arith.constant 0 : i32
    return %c0_i32, %c0_i32_0 : i32, i32
  }
  func.func @transform_3(%arg0: i32) -> (i32, i32) {
    %c0_i32 = arith.constant 0 : i32
    %c0_i32_0 = arith.constant 0 : i32
    return %arg0, %c0_i32 : i32, i32
  }
}

</mosaic_0001>

<llo_original>
// kernel: tpu_custom_call.1
$region0: #{tpu_custom_call.1}
  #allocation0 [shape = 'u32[]', space=smem, size = 0x4, offset = 0x4, fixed_abs, tag = 'smem constant byte address 0x4 - core index']
  #allocation1 [shape = 'u32[144,128]{1,0:T(1,128)}', space=vmem, size = 0x12000, scoped, tag = 'internal scratch']
  %s0 = inlined_call_operand.hbm [shape: bf16[16,128], index: 0, kind: input, shape index: {}]
  %s1 = inlined_call_operand.hbm [shape: f32[128,128], index: 1, kind: input, shape index: {}]
  %s2 = inlined_call_operand.vmem [shape: f32[1,128], index: 2, kind: input, shape index: {}]
  %s3 = inlined_call_operand.hbm [shape: f32[16,128], index: 3, kind: output, shape index: {}]
  %s4 = sld [smem:[#allocation0]]
  $region53: #{tpu_custom_call.1} parent=0
    _
  %s6 = ssub.s32 1, %s4
  %s7 = scalar_select 0, %s6, %s4
  $region1: #{tpu_custom_call.1} parent=0
    #allocation2 [shape = 'u8[4096]{0}', space=vmem, size = 0x1000, scoped, tag = 'input window, operand 0']
    #allocation3 [shape = 's32[2]{0}', space=sflag, size = 0x8, scoped, tag = 'scoped memory for tpu_custom_call.1']
    #allocation4 [shape = 's32[2]{0}', space=sflag, size = 0x8, scoped, tag = 'scoped memory for tpu_custom_call.1']
    #allocation5 [shape = 'u8[65536]{0}', space=vmem, size = 0x10000, scoped, tag = 'input window, operand 1, single buffered']
    #allocation6 [shape = 's32[1]{0}', space=sflag, size = 0x4, scoped, tag = 'scoped memory for tpu_custom_call.1']
    #allocation7 [shape = 'u8[8192]{0}', space=vmem, size = 0x2000, scoped, tag = 'output window, operand 0']
    %8 = vsyncpa [#allocation3], 0
    %s9 = scalar_lea.sflag [#allocation3], 1
    %10 = vsyncpa %s9, 0
    %11 = vsyncpa [#allocation6], 0
    %12 = vsyncpa [#allocation4], 0
    %s13 = scalar_lea.sflag [#allocation4], 1
    %14 = vsyncpa %s13, 0
    loop: start=0, step=1, limit=4
    $region2: #{tpu_custom_call.1} parent=1 // loop_pre_header
      _
    $region3: #{tpu_custom_call.1} parent=1 // loop_header
      %s16 = sphi 0, %s20
      %p17 = scmp.ge.s32.totalorder %s16, 4
      %s26 = sphi 0, %s28
      %s29 = sphi 0, %s26
      %s30 = sphi 0, %s29
      %s46 = sphi 0, %s30
      %s50 = sphi 0, %s50
      %s52 = sphi 0, %s50
      %s53 = sphi 0, %s52
      %s67 = sphi 0, %s53
      %s71 = sphi 0, %s71
      %s73 = sphi 0, %s71
      %s74 = sphi 0, %s73
      %s88 = sphi 0, %s74
      %s94 = sphi 0, %s96
      %s97 = sphi 0, %s94
      %s98 = sphi 0, %s97
      %s114 = sphi 0, %s98
    $region4: #{tpu_custom_call.1} parent=1 // loop_header_branch
      %19 = sbr.rel (%p17) target = $region8
    $region5: #{tpu_custom_call.1} parent=1 // loop_body
      %s21 = ssub.s32 %s16, 1
      %s22 = ssub.s32 %s16, 2
      %s23 = sadd.s32 %s16, 1
      %s24 = ssub.s32 %s16, %s23
      %p25 = scmp.eq.s32.totalorder %s24, 0
      %s27 = sadd.s32 %s26, 1
      %s28 = scalar_select %p25, %s26, %s27
      %p31 = pneg %p25
      %p32 = scmp.eq.s32.totalorder %s16, 1
      %p33 = por %p31, %p32
      %p34 = scmp.ne.s32.totalorder %s26, %s29
      %p35 = scmp.eq.s32.totalorder %s16, 0
      %p36 = por %p34, %p35
      %p37 = scmp.ne.s32.totalorder %s26, %s29
      %p38 = scmp.eq.s32.totalorder %s21, 1
      %p39 = por %p37, %p38
      %p40 = scmp.ne.s32.totalorder %s29, %s30
      %p41 = scmp.eq.s32.totalorder %s21, 0
      %p42 = por %p40, %p41
      %p43 = scmp.ne.s32.totalorder %s29, %s30
      %p44 = scmp.eq.s32.totalorder %s22, 1
      %p45 = por %p43, %p44
      %p47 = scmp.ne.s32.totalorder %s30, %s46
      %p48 = scmp.eq.s32.totalorder %s22, 0
      %p49 = por %p47, %p48
      %s51 = sadd.s32 %s50, 1
      %p54 = scmp.eq.s32.totalorder %s16, 1
      %p55 = scmp.ne.s32.totalorder %s50, %s52
      %p56 = scmp.eq.s32.totalorder %s16, 0
      %p57 = por %p55, %p56
      %p58 = scmp.ne.s32.totalorder %s50, %s52
      %p59 = scmp.eq.s32.totalorder %s21, 1
      %p60 = por %p58, %p59
      %p61 = scmp.ne.s32.totalorder %s52, %s53
      %p62 = scmp.eq.s32.totalorder %s21, 0
      %p63 = por %p61, %p62
      %p64 = scmp.ne.s32.totalorder %s52, %s53
      %p65 = scmp.eq.s32.totalorder %s22, 1
      %p66 = por %p64, %p65
      %p68 = scmp.ne.s32.totalorder %s53, %s67
      %p69 = scmp.eq.s32.totalorder %s22, 0
      %p70 = por %p68, %p69
      %s72 = sadd.s32 %s71, 1
      %p75 = scmp.eq.s32.totalorder %s16, 1
      %p76 = scmp.ne.s32.totalorder %s71, %s73
      %p77 = scmp.eq.s32.totalorder %s16, 0
      %p78 = por %p76, %p77
      %p79 = scmp.ne.s32.totalorder %s71, %s73
      %p80 = scmp.eq.s32.totalorder %s21, 1
      %p81 = por %p79, %p80
      %p82 = scmp.ne.s32.totalorder %s73, %s74
      %p83 = scmp.eq.s32.totalorder %s21, 0
      %p84 = por %p82, %p83
      %p85 = scmp.ne.s32.totalorder %s73, %s74
      %p86 = scmp.eq.s32.totalorder %s22, 1
      %p87 = por %p85, %p86
      %p89 = scmp.ne.s32.totalorder %s74, %s88
      %p90 = scmp.eq.s32.totalorder %s22, 0
      %p91 = por %p89, %p90
      %s92 = ssub.s32 %s16, %s23
      %p93 = scmp.eq.s32.totalorder %s92, 0
      %s95 = sadd.s32 %s94, 1
      %s96 = scalar_select %p93, %s94, %s95
      %p99 = pneg %p93
      %p100 = scmp.eq.s32.totalorder %s16, 1
      %p101 = por %p99, %p100
      %p102 = scmp.ne.s32.totalorder %s94, %s97
      %p103 = scmp.eq.s32.totalorder %s16, 0
      %p104 = por %p102, %p103
      %p105 = scmp.ne.s32.totalorder %s94, %s97
      %p106 = scmp.eq.s32.totalorder %s21, 1
      %p107 = por %p105, %p106
      %p108 = scmp.ne.s32.totalorder %s97, %s98
      %p109 = scmp.eq.s32.totalorder %s21, 0
      %p110 = por %p108, %p109
      %p111 = scmp.ne.s32.totalorder %s97, %s98
      %p112 = scmp.eq.s32.totalorder %s22, 1
      %p113 = por %p111, %p112
      %p115 = scmp.ne.s32.totalorder %s98, %s114
      %p116 = scmp.eq.s32.totalorder %s22, 0
      %p117 = por %p115, %p116
      %p118 = scmp.le.s32.totalorder 1, %s16
      %p119 = scmp.lt.s32.totalorder %s16, 3
      %p120 = pnand %p118, %p119
      %p121 = pneg %p120
      // Predicated region
      $region9: #{tpu_custom_call.1} parent=5 // pred_check
        _
      $region10: #{tpu_custom_call.1} parent=5 // pred_check_branch
        %123 = sbr.rel (%p120) target = $region12
      $region11: #{tpu_custom_call.1} parent=5 // pred_region
        %s124 = ssub.s32 %s16, 1
        // Predicated region
        $region13: #{tpu_custom_call.1} parent=11 // pred_check
          %p125 = pneg %p63
        $region14: #{tpu_custom_call.1} parent=11 // pred_check_branch
          %127 = sbr.rel (%p125) target = $region16
        $region15: #{tpu_custom_call.1} parent=11 // pred_region
          %s129 = ssub.s32 2048, 2048
          %130 = vsyncadd [#allocation6], %s129
          %s131 = sshll.u32 [#allocation5], 4
          %s132 = int_to_ptr.vmem [resolvable:$true] %s131
          %137 = dma.hbm_to_vmem [thread:$0]  %s1, 2048, %s132, [#allocation6], 128, 128, 8
        $region16: #{tpu_custom_call.1} parent=11 // pred_fallthru
          _
        // Predicated region
        $region17: #{tpu_custom_call.1} parent=11 // pred_check
          %p138 = pneg %p84
        $region18: #{tpu_custom_call.1} parent=11 // pred_check_branch
          %140 = sbr.rel (%p138) target = $region20
        $region19: #{tpu_custom_call.1} parent=11 // pred_region
          _
        $region20: #{tpu_custom_call.1} parent=11 // pred_fallthru
          _
      $region12: #{tpu_custom_call.1} parent=5 // pred_fallthru
        _
      %p141 = scmp.lt.s32.totalorder %s16, 2
      // Predicated region
      $region21: #{tpu_custom_call.1} parent=5 // pred_check
        %p142 = pneg %p141
      $region22: #{tpu_custom_call.1} parent=5 // pred_check_branch
        %144 = sbr.rel (%p142) target = $region24
      $region23: #{tpu_custom_call.1} parent=5 // pred_region
        // Predicated region
        $region25: #{tpu_custom_call.1} parent=23 // pred_check
          %p145 = pneg %p36
        $region26: #{tpu_custom_call.1} parent=23 // pred_check_branch
          %147 = sbr.rel (%p145) target = $region28
        $region27: #{tpu_custom_call.1} parent=23 // pred_region
          %s148 = sand.u32 %s26, 1
          %s149 = scalar_lea.sflag [#allocation3], %s148
          %s150 = sand.u32 %s26, 1
          %s151 = smul.addr %s150, 4
          %s152 = scalar_lea.vmem [#allocation2], %s151
          %s154 = ssub.s32 64, 64
          %155 = vsyncadd %s149, %s154
          %s156 = smul.addr %s16, 64
          %s157 = scalar_lea.hbm %s0, %s156
          %s159 = sshll.u32 %s152, 4
          %s160 = int_to_ptr.vmem [resolvable:$true] %s159
          %162 = dma.hbm_to_vmem [thread:$0]  %s157, 64, %s160, %s149
        $region28: #{tpu_custom_call.1} parent=23 // pred_fallthru
          _
      $region24: #{tpu_custom_call.1} parent=5 // pred_fallthru
        _
      %p163 = scmp.le.s32.totalorder 1, %s16
      %p164 = scmp.lt.s32.totalorder %s16, 3
      %p165 = pnand %p163, %p164
      %p166 = pneg %p165
      // Predicated region
      $region29: #{tpu_custom_call.1} parent=5 // pred_check
        _
      $region30: #{tpu_custom_call.1} parent=5 // pred_check_branch
        %168 = sbr.rel (%p165) target = $region32
      $region31: #{tpu_custom_call.1} parent=5 // pred_region
        %s169 = ssub.s32 %s16, 1
        %s170 = sand.u32 %s29, 1
        %s171 = scalar_lea.sflag [#allocation3], %s170
        %s172 = sand.u32 %s29, 1
        %s173 = smul.addr %s172, 4
        %s174 = scalar_lea.vmem [#allocation2], %s173
        // Predicated region
        $region33: #{tpu_custom_call.1} parent=31 // pred_check
          %p175 = pneg %p42
        $region34: #{tpu_custom_call.1} parent=31 // pred_check_branch
          %177 = sbr.rel (%p175) target = $region36
        $region35: #{tpu_custom_call.1} parent=31 // pred_region
          %178 = dma.done %s171, 64
        $region36: #{tpu_custom_call.1} parent=31 // pred_fallthru
          _
        // Predicated region
        $region37: #{tpu_custom_call.1} parent=31 // pred_check
          %p179 = pneg %p63
        $region38: #{tpu_custom_call.1} parent=31 // pred_check_branch
          %181 = sbr.rel (%p179) target = $region40
        $region39: #{tpu_custom_call.1} parent=31 // pred_region
          %182 = dma.done [#allocation6], 2048
        $region40: #{tpu_custom_call.1} parent=31 // pred_fallthru
          _
        %s183 = sand.u32 %s29, 1
        %s184 = scalar_lea.sflag [#allocation3], %s183
        %s185 = sand.u32 %s29, 1
        %s186 = smul.addr %s185, 4
        %s187 = scalar_lea.vmem [#allocation2], %s186
        %p188 = pneg %p42
        %p189 = pneg %p39
        %p190 = pneg %p63
        %p191 = pneg %p60
        %p192 = pneg %p84
        %p193 = pneg %p81
        %p194 = pneg %p110
        %p195 = pneg %p107
        %s196 = sand.u32 %s97, 1
        %s197 = scalar_lea.sflag [#allocation4], %s196
        %s198 = sand.u32 %s97, 1
        %s199 = smul.addr %s198, 8
        %s200 = scalar_lea.vmem [#allocation7], %s199
        %v201 = vld [vmem:[%s174] sm:$0xf]
        %v202 = vunpack.c.l.bf16 %v201
        %v203 = vld [vmem:[#allocation5] sm:$0xff]
        %v204 = vld [vmem:[#allocation5 + $0x8] sm:$0xff]
        %v205 = vld [vmem:[#allocation5 + $0x10] sm:$0xff]
        %v206 = vld [vmem:[#allocation5 + $0x18] sm:$0xff]
        %v207 = vld [vmem:[#allocation5 + $0x20] sm:$0xff]
        %v208 = vld [vmem:[#allocation5 + $0x28] sm:$0xff]
        %v209 = vld [vmem:[#allocation5 + $0x30] sm:$0xff]
        %v210 = vld [vmem:[#allocation5 + $0x38] sm:$0xff]
        %v211 = vld [vmem:[#allocation5 + $0x40] sm:$0xff]
        %v212 = vld [vmem:[#allocation5 + $0x48] sm:$0xff]
        %v213 = vld [vmem:[#allocation5 + $0x50] sm:$0xff]
        %v214 = vld [vmem:[#allocation5 + $0x58] sm:$0xff]
        %v215 = vld [vmem:[#allocation5 + $0x60] sm:$0xff]
        %v216 = vld [vmem:[#allocation5 + $0x68] sm:$0xff]
        %v217 = vld [vmem:[#allocation5 + $0x70] sm:$0xff]
        %v218 = vld [vmem:[#allocation5 + $0x78] sm:$0xff]
        %v219 = vld [vmem:[%s2] sm:$0x1]
        %v221 = vlaneseq
        %v222 = vshrl.u32 %v221, 7
        %v223 = vsub.s32 0, %v222
        %v224 = vrot.slane %v219, %v223
        %226 = vmatprep.subr.mxu0 0.0
        %227 = vmatpush1.msra.mxu0 %v218
        %228 = vmatprep.subr.mxu0 0.0
        %229 = vmatpush1.msra.mxu0 %v217
        %230 = vmatprep.subr.mxu0 0.0
        %231 = vmatpush1.msra.mxu0 %v216
        %232 = vmatprep.subr.mxu0 0.0
        %233 = vmatpush1.msra.mxu0 %v215
        %234 = vmatprep.subr.mxu0 0.0
        %235 = vmatpush1.msra.mxu0 %v214
        %236 = vmatprep.subr.mxu0 0.0
        %237 = vmatpush1.msra.mxu0 %v213
        %238 = vmatprep.subr.mxu0 0.0
        %239 = vmatpush1.msra.mxu0 %v212
        %240 = vmatprep.subr.mxu0 0.0
        %241 = vmatpush1.msra.mxu0 %v211
        %242 = vmatprep.subr.mxu0 0.0
        %243 = vmatpush1.msra.mxu0 %v210
        %244 = vmatprep.subr.mxu0 0.0
        %245 = vmatpush1.msra.mxu0 %v209
        %246 = vmatprep.subr.mxu0 0.0
        %247 = vmatpush1.msra.mxu0 %v208
        %248 = vmatprep.subr.mxu0 0.0
        %249 = vmatpush1.msra.mxu0 %v207
        %250 = vmatprep.subr.mxu0 0.0
        %251 = vmatpush1.msra.mxu0 %v206
        %252 = vmatprep.subr.mxu0 0.0
        %253 = vmatpush1.msra.mxu0 %v205
        %254 = vmatprep.subr.mxu0 0.0
        %255 = vmatpush1.msra.mxu0 %v204
        %256 = vmatprep.subr.mxu0 0.0
        %257 = vmatpush1.msra.mxu0 %v203
        %258 = vmatprep.subr.mxu0 0.0
        %259 = vmatpush2.msra.mxu0 0.0
        %260 = vmatprep.subr.mxu0 0.0
        %261 = vmatpush2.msra.mxu0 0.0
        %262 = vmatprep.subr.mxu0 0.0
        %263 = vmatpush2.msra.mxu0 0.0
        %264 = vmatprep.subr.mxu0 0.0
        %265 = vmatpush2.msra.mxu0 0.0
        %266 = vmatprep.subr.mxu0 0.0
        %267 = vmatpush2.msra.mxu0 0.0
        %268 = vmatprep.subr.mxu0 0.0
        %269 = vmatpush2.msra.mxu0 0.0
        %270 = vmatprep.subr.mxu0 0.0
        %271 = vmatpush2.msra.mxu0 0.0
        %272 = vmatprep.subr.mxu0 0.0
        %273 = vmatpush2.msra.mxu0 0.0
        %274 = vmatprep.subr.mxu0 0.0
        %275 = vmatpush2.msra.mxu0 0.0
        %276 = vmatprep.subr.mxu0 0.0
        %277 = vmatpush2.msra.mxu0 0.0
        %278 = vmatprep.subr.mxu0 0.0
        %279 = vmatpush2.msra.mxu0 0.0
        %280 = vmatprep.subr.mxu0 0.0
        %281 = vmatpush2.msra.mxu0 0.0
        %282 = vmatprep.subr.mxu0 0.0
        %283 = vmatpush2.msra.mxu0 0.0
        %284 = vmatprep.subr.mxu0 0.0
        %285 = vmatpush2.msra.mxu0 0.0
        %286 = vmatprep.subr.mxu0 0.0
        %287 = vmatpush2.msra.mxu0 0.0
        %288 = vmatprep.subr.mxu0 0.0
        %289 = vmatpush2.msra.mxu0 0.0
        %290 = vmatprep.mubr.f32.mxu0 0.0
        %291 = vmatmul.mubr.f32.gmra.mxu0 %v202
        %v292 = vpop.f32.mrf.mxu0
        %v293 = vadd.f32 %v224, %v292
        %v294 = vpop.f32.mrf.mxu0
        %295 = vdwg.mxu0
        %296 = vmax.xlane.f32.xlu0 %v293
        %v297 = vpop.xlane.xlu0 %296
        %v298 = vsub.f32 %v293, %v297
        %v299 = vmul.f32 %v298, 1.442695
        %v300 = vpow.pop %v299
        %301 = vadd.xlane.f32.xlu0 %v300
        %v302 = vpop.xlane.xlu0 %301
        %v303 = vlog2.pop %v302
        %v304 = vmul.f32 %v303, 0.6931472
        %v305 = vsub.f32 %v298, %v304
        %306 = vst [vmem:[%s200] sm:$0xff] %v305
        %s307 = sand.u32 %s97, 1
        %s308 = scalar_lea.sflag [#allocation4], %s307
        %s309 = sand.u32 %s97, 1
        %s310 = smul.addr %s309, 8
        %s311 = scalar_lea.vmem [#allocation7], %s310
        // Predicated region
        $region41: #{tpu_custom_call.1} parent=31 // pred_check
          %p312 = pneg %p107
        $region42: #{tpu_custom_call.1} parent=31 // pred_check_branch
          %314 = sbr.rel (%p312) target = $region44
        $region43: #{tpu_custom_call.1} parent=31 // pred_region
          %s316 = ssub.s32 128, 128
          %317 = vsyncadd %s308, %s316
          %s318 = smul.addr %s21, 128
          %s319 = scalar_lea.hbm %s3, %s318
          %s321 = sshll.u32 %s311, 4
          %s322 = int_to_ptr.vmem [resolvable:$true] %s321
          %324 = dma.vmem_to_hbm [thread:$0]  %s322, 128, %s319, %s308
        $region44: #{tpu_custom_call.1} parent=31 // pred_fallthru
          _
      $region32: #{tpu_custom_call.1} parent=5 // pred_fallthru
        _
      %p325 = scmp.le.s32.totalorder 2, %s16
      // Predicated region
      $region45: #{tpu_custom_call.1} parent=5 // pred_check
        %p326 = pneg %p325
      $region46: #{tpu_custom_call.1} parent=5 // pred_check_branch
        %328 = sbr.rel (%p326) target = $region48
      $region47: #{tpu_custom_call.1} parent=5 // pred_region
        %s329 = ssub.s32 %s16, 2
        // Predicated region
        $region49: #{tpu_custom_call.1} parent=47 // pred_check
          %p330 = pneg %p113
        $region50: #{tpu_custom_call.1} parent=47 // pred_check_branch
          %332 = sbr.rel (%p330) target = $region52
        $region51: #{tpu_custom_call.1} parent=47 // pred_region
          %s333 = sand.u32 %s98, 1
          %s334 = scalar_lea.sflag [#allocation4], %s333
          %s335 = sand.u32 %s98, 1
          %s336 = smul.addr %s335, 8
          %s337 = scalar_lea.vmem [#allocation7], %s336
          %338 = dma.done %s334, 128
        $region52: #{tpu_custom_call.1} parent=47 // pred_fallthru
          _
      $region48: #{tpu_custom_call.1} parent=5 // pred_fallthru
        _
    $region6: #{tpu_custom_call.1} parent=1 // loop_footer
      %s20 = sadd.s32 1, %s16
    $region7: #{tpu_custom_call.1} parent=1 // loop_footer_branch
      %15 = sbr.rel target = $region3
    $region8: #{tpu_custom_call.1} parent=1 // loop_exit
      _
    %339 = vsyncpa [#allocation3], 1
    %s340 = scalar_lea.sflag [#allocation3], 1
    %341 = vsyncpa %s340, 1
    %342 = vsyncpa [#allocation6], 1
    %343 = vsyncpa [#allocation4], 1
    %s344 = scalar_lea.sflag [#allocation4], 1
    %345 = vsyncpa %s344, 1

</llo_original>
